<compile_context>
chip_gen: v5e
topology: v5e:2x2
jax: 0.10.0
libtpu: 0.0.40
codegen_flags: <defaults>
</compile_context>

<pallas_src>
import functools

import jax
import jax.numpy as jnp
from jax import lax
from jax.experimental import pallas as pl
from jax.experimental.pallas import tpu as pltpu

_LANE = 128          # TPU vreg lane width
_SUB = 16            # row-tile alignment (bf16 sublane packing)
_INTERM_BUDGET = 8 << 20   # cap on the f32 (tm, th) GELU intermediate


def _round_up(x, m):
    return (x + m - 1) // m * m


@functools.lru_cache(maxsize=1)
def _physical_vmem_bytes():
    try:
        v = getattr(pltpu.get_tpu_info(), "vmem_capacity_bytes", None)
        if v:
            return int(v)
    except Exception:
        pass
    return 64 << 20  # conservative fallback: v7x per-TensorCore VMEM


def _exact_gelu(x):
    # nn.GELU() default = exact erf formulation; computed in f32 inside the kernel.
    return 0.5 * x * (1.0 + lax.erf(x * 0.7071067811865476))


def le_mlp_kernel(x_ref, w1_ref, b1_ref, w2_ref, b2_ref, o_ref, acc_ref):
    """One (row-tile, hidden-chunk) grid step of fc1 -> GELU -> fc2."""
    h_id = pl.program_id(1)

    @pl.when(h_id == 0)
    def _():
        acc_ref[...] = jnp.zeros_like(acc_ref)

    # fc1 chunk: cast the streamed x tile to the matmul dtype in-register (no HBM
    # pre-pass); MXU accumulates in f32. Stale rows of a partial last row tile produce
    # garbage here but their output rows are clipped on writeback (no FP traps on TPU).
    xb = x_ref[...].astype(w1_ref.dtype)
    h = jnp.dot(xb, w1_ref[...], preferred_element_type=jnp.float32)
    h = _exact_gelu(h + b1_ref[...])          # drop1 is identity (p=0 / eval)

    # fc2 partial product for this hidden chunk, accumulated in f32 scratch.
    acc_ref[...] += jnp.dot(h.astype(w2_ref.dtype), w2_ref[...],
                            preferred_element_type=jnp.float32)

    @pl.when(h_id == pl.num_programs(1) - 1)
    def _():
        o_ref[...] = (acc_ref[...] + b2_ref[...]).astype(o_ref.dtype)  # drop2 identity


@functools.partial(
    jax.jit, static_argnames=("tm", "compute_dtype", "out_dtype", "hidden_chunk"))
def le_mlp_forward(x, w1, b1, w2, b2, *, tm=512, compute_dtype=jnp.bfloat16,
                   out_dtype=None, hidden_chunk=None):
    """x: (B, N, D); w1: (D, H); b1: (H,); w2: (H, Do); b2: (Do,)."""
    B, N, D = x.shape
    H = w1.shape[1]
    Do = w2.shape[1]
    M = B * N
    out_dtype = x.dtype if out_dtype is None else out_dtype

    xbytes = x.dtype.itemsize
    cbytes = jnp.dtype(compute_dtype).itemsize
    obytes = jnp.dtype(out_dtype).itemsize

    # ---- Row tile: big by default, clamped for tiny inputs, multiple of 16; split so
    # the "parallel" row axis has >= 2 steps for v7x megacore sharding when M allows.
    tm = min(max(tm, _SUB), _round_up(M, _SUB))
    tm = _round_up(tm, _SUB)
    if M >= 256 and pl.cdiv(M, tm) < 2:
        tm = _round_up(pl.cdiv(M, 2), _SUB)
    n_i = pl.cdiv(M, tm)

    # ---- Hidden-dim chunk: bound the f32 (tm, th) GELU intermediate. th | Hp so the
    # zero-padded hidden units stay exactly neutral (GELU(0)=0 contributes 0 via W2).
    Hp = _round_up(H, _LANE)
    if hidden_chunk is not None:
        th = min(_round_up(hidden_chunk, _LANE), Hp)
    elif tm * Hp * 4 > _INTERM_BUDGET:
        th = min(max(512, (_INTERM_BUDGET // (tm * 4)) // _LANE * _LANE), Hp)
    else:
        th = Hp
    Hp = _round_up(H, th)
    n_h = Hp // th

    # ---- Only the small, resident params are padded/cast up-front (one-time cost);
    # x streams untouched and the output needs no slicing (full-Do blocks, free reshape).
    w1p = jnp.pad(w1.astype(compute_dtype), ((0, 0), (0, Hp - H)))
    b1p = jnp.pad(b1.astype(jnp.float32), ((0, Hp - H),)).reshape(1, Hp)
    w2p = jnp.pad(w2.astype(compute_dtype), ((0, Hp - H), (0, 0)))
    b2p = b2.astype(jnp.float32).reshape(1, Do)
    x2 = x.reshape(M, D)

    # Single-buffer grid-invariant blocks (halves resident-weight VMEM); keep default
    # double-buffering when the hidden axis streams weight chunks.
    w_pm = pl.Buffered(1) if n_h == 1 else None
    b2_pm = pl.Buffered(1)

    # ---- Advisory cost estimate for XLA's scheduler.
    wt_bytes = (D * Hp + Hp * Do) * cbytes + (Hp + Do) * 4
    cost = pl.CostEstimate(
        flops=2 * M * (D * Hp + Hp * Do),
        transcendentals=M * Hp,                       # erf in the exact GELU
        bytes_accessed=(M * D * xbytes + M * Do * obytes
                        + wt_bytes * (1 if n_h == 1 else n_i)),
    )

    # ---- Generation-aware VMEM budget derived from the actual tile sizes.
    wbuf = 1 if n_h == 1 else 2
    vmem_est = (2 * tm * D * xbytes                    # x tiles (double-buffered)
                + 2 * tm * Do * obytes                 # out tiles (double-buffered)
                + wbuf * (D * th + th * Do) * cbytes   # weight chunks
                + wbuf * th * 4 + Do * 4               # biases (f32)
                + tm * Do * 4                          # f32 accumulator scratch
                + tm * th * (4 + cbytes))              # GELU intermediate + bf16 copy
    vmem_cap = int(0.75 * _physical_vmem_bytes())      # ~48 MiB v7x, ~96 MiB v5e/v6e
    vmem_limit = int(min(max(2 * vmem_est, 32 << 20), vmem_cap))

    out2 = pl.pallas_call(
        le_mlp_kernel,
        out_shape=jax.ShapeDtypeStruct((M, Do), out_dtype),
        grid_spec=pltpu.PrefetchScalarGridSpec(
            num_scalar_prefetch=0,
            grid=(n_i, n_h),
            in_specs=[
                pl.BlockSpec((tm, D), lambda i, h: (i, 0)),                       # x rows
                pl.BlockSpec((D, th), lambda i, h: (0, h), pipeline_mode=w_pm),   # W1
                pl.BlockSpec((1, th), lambda i, h: (0, h), pipeline_mode=w_pm),   # b1
                pl.BlockSpec((th, Do), lambda i, h: (h, 0), pipeline_mode=w_pm),  # W2
                pl.BlockSpec((1, Do), lambda i, h: (0, 0), pipeline_mode=b2_pm),  # b2
            ],
            out_specs=pl.BlockSpec((tm, Do), lambda i, h: (i, 0)),
            scratch_shapes=[pltpu.VMEM((tm, Do), jnp.float32)],
        ),
        compiler_params=pltpu.CompilerParams(
            dimension_semantics=("parallel", "arbitrary"),
            vmem_limit_bytes=vmem_limit,
        ),
        cost_estimate=cost,
    )(x2, w1p, b1p, w2p, b2p)

    return out2.reshape(B, N, Do)


def make_le_linear_params(key, in_features, out_features, ilayer, dtype=jnp.float32):
    """Synthesize LELinear params (base + k) and collapse to the effective
    (in, out) weight / (out,) bias for a given ilayer (linear expansion)."""
    k_wb, k_wk, k_bb, k_bk = jax.random.split(key, 4)
    scale = 0.02
    w_base = scale * jax.random.normal(k_wb, (out_features, in_features), dtype)
    w_k = scale * jax.random.normal(k_wk, (out_features, in_features), dtype)
    b_base = scale * jax.random.normal(k_bb, (out_features,), dtype)
    b_k = scale * jax.random.normal(k_bk, (out_features,), dtype)
    w_eff = w_base + ilayer * w_k          # (out, in)
    b_eff = b_base + ilayer * b_k          # (out,)
    return w_eff.T, b_eff                  # (in, out) for x @ W


def reference_forward(x, w1, b1, w2, b2):
    h = jnp.einsum("bnd,dh->bnh", x, w1) + b1
    h = _exact_gelu(h)
    return jnp.einsum("bnh,ho->bno", h, w2) + b2


if __name__ == "__main__":
    # Module config (small, consistent with a ViT MLP block):
    #   in_features = 32, hidden_features = 64, out_features = 32
    #   num_layers = 12, schedule = {"mlp_fc1": ([12],[True]), "mlp_fc2": ([12],[True])}
    #   -> a single shared LELinear per fc; layer_id = 5 -> ilayer = 5/12.
    D, Hdim = 32, 64
    num_layers = 12
    layer_id = 5
    ilayer = layer_id / float(num_layers)

    key = jax.random.PRNGKey(0)
    kx, k1, k2, kx2, k3, k4 = jax.random.split(key, 6)

    w1, b1 = make_le_linear_params(k1, D, Hdim, ilayer)      # (D, H), (H,)
    w2, b2 = make_le_linear_params(k2, Hdim, D, ilayer)      # (H, D), (D,)

    # Case 1: tiny token stream (single grid step, no padding anywhere).
    B, N = 2, 8
    x = jax.random.normal(kx, (B, N, D), jnp.float32)
    out = jax.block_until_ready(le_mlp_forward(x, w1, b1, w2, b2))
    ref = reference_forward(x, w1, b1, w2, b2)
    assert out.shape == (B, N, D)
    # bf16 matmul operands with f32 accumulation -> loosened tolerance vs f32 reference.
    assert jnp.allclose(out, ref, atol=5e-3, rtol=5e-2), "mismatch vs reference (case 1)"

    # Case 2: ragged ViT-like token count (partial last row tile + 2 parallel steps).
    B2, N2 = 2, 197
    x_big = jax.random.normal(kx2, (B2, N2, D), jnp.float32)
    out_big = jax.block_until_ready(le_mlp_forward(x_big, w1, b1, w2, b2))
    ref_big = reference_forward(x_big, w1, b1, w2, b2)
    assert out_big.shape == (B2, N2, D)
    assert jnp.allclose(out_big, ref_big, atol=5e-3, rtol=5e-2), "mismatch vs reference (case 2)"

    # Case 3: force the hidden-dim chunked / accumulator path (2 hidden chunks).
    H3 = 256
    w1c, b1c = make_le_linear_params(k3, D, H3, ilayer)
    w2c, b2c = make_le_linear_params(k4, H3, D, ilayer)
    out_c = jax.block_until_ready(
        le_mlp_forward(x, w1c, b1c, w2c, b2c, hidden_chunk=128))
    ref_c = reference_forward(x, w1c, b1c, w2c, b2c)
    assert out_c.shape == (B, N, D)
    assert jnp.allclose(out_c, ref_c, atol=5e-3, rtol=5e-2), "mismatch vs reference (case 3)"

    print("KERNEL_OK")
</pallas_src>

<mosaic_0001>
module attributes {stable_mosaic.version = 11 : i64} {
  func.func @le_mlp_kernel(%arg0: i32, %arg1: i32, %arg2: memref<16x32xf32, #tpu.memory_space<vmem>>, %arg3: memref<32x128xbf16, #tpu.memory_space<vmem>>, %arg4: memref<1x128xf32, #tpu.memory_space<vmem>>, %arg5: memref<128x32xbf16, #tpu.memory_space<vmem>>, %arg6: memref<1x32xf32, #tpu.memory_space<vmem>>, %arg7: memref<16x32xf32, #tpu.memory_space<vmem>>, %arg8: memref<16x32xf32, #tpu.memory_space<vmem>>) attributes {dimension_semantics = [#tpu.dimension_semantics<parallel>, #tpu.dimension_semantics<arbitrary>], iteration_bounds = array<i64: 1, 1>, scalar_prefetch = 0 : i64, scratch_operands = 1 : i64, tpu.core_type = #tpu.core_type<tc>, window_params = [{transform_indices = @transform_0, window_bounds = array<i64: 16, 32>}, {pipeline_mode = #tpu.pipeline_mode<synchronous>, transform_indices = @transform_1, window_bounds = array<i64: 32, 128>}, {pipeline_mode = #tpu.pipeline_mode<synchronous>, transform_indices = @transform_2, window_bounds = array<i64: 1, 128>}, {pipeline_mode = #tpu.pipeline_mode<synchronous>, transform_indices = @transform_3, window_bounds = array<i64: 128, 32>}, {pipeline_mode = #tpu.pipeline_mode<synchronous>, transform_indices = @transform_4, window_bounds = array<i64: 1, 32>}, {transform_indices = @transform_5, window_bounds = array<i64: 16, 32>}]} {
    %c0_i32 = arith.constant 0 : i32
    %0 = arith.cmpi eq, %arg1, %c0_i32 : i32
    %1 = arith.extui %0 : i1 to i32
    %c0_i32_0 = arith.constant 0 : i32
    %2 = arith.cmpi ne, %1, %c0_i32_0 : i32
    scf.if %2 {
      %cst_18 = arith.constant 0.000000e+00 : f32
      %27 = vector.broadcast %cst_18 : f32 to vector<16x32xf32>
      %c0_19 = arith.constant 0 : index
      %c0_20 = arith.constant 0 : index
      %28 = vector.load %arg8[%c0_19, %c0_20] : memref<16x32xf32, #tpu.memory_space<vmem>>, vector<16x32xf32>
      tpu.vector_store %arg8[%c0_19, %c0_20], %27 {strides = array<i32>} : memref<16x32xf32, #tpu.memory_space<vmem>>, vector<16x32xf32>,
    } else {
    }
    %c0 = arith.constant 0 : index
    %c0_1 = arith.constant 0 : index
    %3 = vector.load %arg2[%c0, %c0_1] : memref<16x32xf32, #tpu.memory_space<vmem>>, vector<16x32xf32>
    %4 = arith.truncf %3 : vector<16x32xf32> to vector<16x32xbf16>
    %c0_2 = arith.constant 0 : index
    %c0_3 = arith.constant 0 : index
    %5 = vector.load %arg3[%c0_2, %c0_3] : memref<32x128xbf16, #tpu.memory_space<vmem>>, vector<32x128xbf16>
    %cst = arith.constant dense<0.000000e+00> : vector<16x128xf32>
    %6 = tpu.matmul %4, %5, %cst {dimension_numbers = #tpu.dot_dimension_numbers<[1], [0], [0], [1], [0, 0, 1, 1], [], []>} : vector<16x32xbf16>, vector<32x128xbf16>, vector<16x128xf32> -> vector<16x128xf32>
    %c0_4 = arith.constant 0 : index
    %c0_5 = arith.constant 0 : index
    %7 = vector.load %arg4[%c0_4, %c0_5] : memref<1x128xf32, #tpu.memory_space<vmem>>, vector<1x128xf32>
    %8 = vector.broadcast %7 : vector<1x128xf32> to vector<16x128xf32>
    %9 = arith.addf %6, %8 : vector<16x128xf32>
    %cst_6 = arith.constant 5.000000e-01 : f32
    %10 = vector.broadcast %cst_6 : f32 to vector<16x128xf32>
    %11 = arith.mulf %10, %9 : vector<16x128xf32>
    %cst_7 = arith.constant 0.707106769 : f32
    %12 = vector.broadcast %cst_7 : f32 to vector<16x128xf32>
    %13 = arith.mulf %9, %12 : vector<16x128xf32>
    %14 = math.erf %13 : vector<16x128xf32>
    %cst_8 = arith.constant 1.000000e+00 : f32
    %15 = vector.broadcast %cst_8 : f32 to vector<16x128xf32>
    %16 = arith.addf %15, %14 : vector<16x128xf32>
    %17 = arith.mulf %11, %16 : vector<16x128xf32>
    %c0_9 = arith.constant 0 : index
    %c0_10 = arith.constant 0 : index
    %18 = vector.load %arg8[%c0_9, %c0_10] : memref<16x32xf32, #tpu.memory_space<vmem>>, vector<16x32xf32>
    %19 = arith.truncf %17 : vector<16x128xf32> to vector<16x128xbf16>
    %c0_11 = arith.constant 0 : index
    %c0_12 = arith.constant 0 : index
    %20 = vector.load %arg5[%c0_11, %c0_12] : memref<128x32xbf16, #tpu.memory_space<vmem>>, vector<128x32xbf16>
    %cst_13 = arith.constant dense<0.000000e+00> : vector<16x32xf32>
    %21 = tpu.matmul %19, %20, %cst_13 {dimension_numbers = #tpu.dot_dimension_numbers<[1], [0], [0], [1], [0, 0, 1, 1], [], []>} : vector<16x128xbf16>, vector<128x32xbf16>, vector<16x32xf32> -> vector<16x32xf32>
    %22 = arith.addf %18, %21 : vector<16x32xf32>
    %c0_14 = arith.constant 0 : index
    %c0_15 = arith.constant 0 : index
    %23 = vector.load %arg8[%c0_14, %c0_15] : memref<16x32xf32, #tpu.memory_space<vmem>>, vector<16x32xf32>
    tpu.vector_store %arg8[%c0_14, %c0_15], %22 {strides = array<i32>} : memref<16x32xf32, #tpu.memory_space<vmem>>, vector<16x32xf32>,
    %c0_i32_16 = arith.constant 0 : i32
    %24 = arith.cmpi eq, %arg1, %c0_i32_16 : i32
    %25 = arith.extui %24 : i1 to i32
    %c0_i32_17 = arith.constant 0 : i32
    %26 = arith.cmpi ne, %25, %c0_i32_17 : i32
    scf.if %26 {
      %c0_18 = arith.constant 0 : index
      %c0_19 = arith.constant 0 : index
      %27 = vector.load %arg8[%c0_18, %c0_19] : memref<16x32xf32, #tpu.memory_space<vmem>>, vector<16x32xf32>
      %c0_20 = arith.constant 0 : index
      %c0_21 = arith.constant 0 : index
      %28 = vector.load %arg6[%c0_20, %c0_21] : memref<1x32xf32, #tpu.memory_space<vmem>>, vector<1x32xf32>
      %29 = vector.broadcast %28 : vector<1x32xf32> to vector<16x32xf32>
      %30 = arith.addf %27, %29 : vector<16x32xf32>
      %c0_22 = arith.constant 0 : index
      %c0_23 = arith.constant 0 : index
      %31 = vector.load %arg7[%c0_22, %c0_23] : memref<16x32xf32, #tpu.memory_space<vmem>>, vector<16x32xf32>
      tpu.vector_store %arg7[%c0_22, %c0_23], %30 {strides = array<i32>} : memref<16x32xf32, #tpu.memory_space<vmem>>, vector<16x32xf32>,
    } else {
    }
    return
  }
  func.func @transform_0(%arg0: i32, %arg1: i32) -> (i32, i32) {
    %c0_i32 = arith.constant 0 : i32
    %c0_i32_0 = arith.constant 0 : i32
    return %arg0, %c0_i32 : i32, i32
  }
  func.func @transform_1(%arg0: i32, %arg1: i32) -> (i32, i32) {
    %c0_i32 = arith.constant 0 : i32
    %c0_i32_0 = arith.constant 0 : i32
    return %c0_i32, %arg1 : i32, i32
  }
  func.func @transform_2(%arg0: i32, %arg1: i32) -> (i32, i32) {
    %c0_i32 = arith.constant 0 : i32
    %c0_i32_0 = arith.constant 0 : i32
    return %c0_i32, %arg1 : i32, i32
  }
  func.func @transform_3(%arg0: i32, %arg1: i32) -> (i32, i32) {
    %c0_i32 = arith.constant 0 : i32
    %c0_i32_0 = arith.constant 0 : i32
    return %arg1, %c0_i32 : i32, i32
  }
  func.func @transform_4(%arg0: i32, %arg1: i32) -> (i32, i32) {
    %c0_i32 = arith.constant 0 : i32
    %c0_i32_0 = arith.constant 0 : i32
    %c0_i32_1 = arith.constant 0 : i32
    return %c0_i32, %c0_i32_0 : i32, i32
  }
  func.func @transform_5(%arg0: i32, %arg1: i32) -> (i32, i32) {
    %c0_i32 = arith.constant 0 : i32
    %c0_i32_0 = arith.constant 0 : i32
    return %arg0, %c0_i32 : i32, i32
  }
}

</mosaic_0001>

<llo_original>
// kernel: le_mlp_forward.1
$region0: #{le_mlp_forward.1}
  #allocation0 [shape = 'u32[]', space=smem, size = 0x4, offset = 0x4, fixed_abs, tag = 'smem constant byte address 0x4 - core index']
  #allocation1 [shape = 'u32[72,128]{1,0:T(1,128)}', space=vmem, size = 0x9000, scoped, tag = 'internal scratch']
  #allocation2 [shape = 'f32[16,32]{1,0:T(8,128)}', space=vmem, size = 0x2000, scoped, tag = 'scratch operand']
  %s0 = inlined_call_operand.vmem [shape: f32[16,32], index: 0, kind: input, shape index: {}]
  %s1 = inlined_call_operand.vmem [shape: bf16[32,128], index: 1, kind: input, shape index: {}]
  %s2 = inlined_call_operand.vmem [shape: f32[1,128], index: 2, kind: input, shape index: {}]
  %s3 = inlined_call_operand.vmem [shape: bf16[128,32], index: 3, kind: input, shape index: {}]
  %s4 = inlined_call_operand.vmem [shape: f32[1,32], index: 4, kind: input, shape index: {}]
  %s5 = inlined_call_operand.hbm [shape: f32[16,32], index: 5, kind: output, shape index: {}]
  %s6 = sld [smem:[#allocation0]]
  $region38: #{le_mlp_forward.1} parent=0
    _
  %s8 = ssub.s32 1, %s6
  %s9 = scalar_select 0, %s8, %s6
  $region1: #{le_mlp_forward.1} parent=0
    #allocation3 [shape = 'u8[8192]{0}', space=vmem, size = 0x2000, scoped, tag = 'output window, operand 0, single buffered']
    #allocation4 [shape = 's32[1]{0}', space=sflag, size = 0x4, scoped, tag = 'scoped memory for le_mlp_forward.1']
    %10 = vsyncpa [#allocation4], 0
    // Predicated region
    $region2: #{le_mlp_forward.1} parent=1 // pred_check
      _
    $region3: #{le_mlp_forward.1} parent=1 // pred_check_branch
      %12 = sbr.rel (0) target = $region5
    $region4: #{le_mlp_forward.1} parent=1 // pred_region
      _
    $region5: #{le_mlp_forward.1} parent=1 // pred_fallthru
      _
    // Predicated region
    $region6: #{le_mlp_forward.1} parent=1 // pred_check
      _
    $region7: #{le_mlp_forward.1} parent=1 // pred_check_branch
      %14 = sbr.rel (0) target = $region9
    $region8: #{le_mlp_forward.1} parent=1 // pred_region
      _
    $region9: #{le_mlp_forward.1} parent=1 // pred_fallthru
      _
    // Predicated region
    $region10: #{le_mlp_forward.1} parent=1 // pred_check
      _
    $region11: #{le_mlp_forward.1} parent=1 // pred_check_branch
      %16 = sbr.rel (0) target = $region13
    $region12: #{le_mlp_forward.1} parent=1 // pred_region
      _
    $region13: #{le_mlp_forward.1} parent=1 // pred_fallthru
      _
    // Predicated region
    $region14: #{le_mlp_forward.1} parent=1 // pred_check
      _
    $region15: #{le_mlp_forward.1} parent=1 // pred_check_branch
      %18 = sbr.rel (0) target = $region17
    $region16: #{le_mlp_forward.1} parent=1 // pred_region
      _
    $region17: #{le_mlp_forward.1} parent=1 // pred_fallthru
      _
    // Predicated region
    $region18: #{le_mlp_forward.1} parent=1 // pred_check
      _
    $region19: #{le_mlp_forward.1} parent=1 // pred_check_branch
      %20 = sbr.rel (0) target = $region21
    $region20: #{le_mlp_forward.1} parent=1 // pred_region
      _
    $region21: #{le_mlp_forward.1} parent=1 // pred_fallthru
      _
    %p22 = scmp.eq.s32.totalorder 0, 0
    // Predicated region
    $region22: #{le_mlp_forward.1} parent=1 // pred_check
      %p23 = pneg %p22
    $region23: #{le_mlp_forward.1} parent=1 // pred_check_branch
      %25 = sbr.rel (%p23) target = $region25
    $region24: #{le_mlp_forward.1} parent=1 // pred_region
      %vm26 = vcmask 261120
      %27 = vst.msk [vmem:[#allocation2] sm:$0xff] %vm26, 0.0
      %28 = vst.msk [vmem:[#allocation2 + $0x8] sm:$0xff] %vm26, 0.0
    $region25: #{le_mlp_forward.1} parent=1 // pred_fallthru
      _
    %v29 = vld [vmem:[%s0] sm:$0xff]
    %v30 = vld [vmem:[%s0 + $0x8] sm:$0xff]
    %v31 = vpack.c.bf16 %v30, %v29
    %v32 = vld [vmem:[%s1] sm:$0xf]
    %v33 = vld [vmem:[%s1 + $0x4] sm:$0xf]
    %v34 = vld [vmem:[%s1 + $0x8] sm:$0xf]
    %v35 = vld [vmem:[%s1 + $0xc] sm:$0xf]
    %v36 = vld [vmem:[%s2] sm:$0x1]
    %v38 = vperm.slane %v36, 0
    %v44 = vunpack.c.l.b16 %v32
    %v45 = vunpack.c.l.b16 %v33
    %v46 = vunpack.c.l.b16 %v34
    %v47 = vunpack.c.l.b16 %v35
    %v48 = vpack.c.b16 %v45, %v44
    %v49 = vpack.c.b16 %v47, %v46
    %vm52 = vcmask 261120
    %v54 = vsel %vm52, %v31, 0
    %56 = vmatpush.bf16.msra.mxu0 0
    %57 = vmatpush.bf16.msra.mxu0 0
    %58 = vmatpush.bf16.msra.mxu0 0
    %59 = vmatpush.bf16.msra.mxu0 0
    %60 = vmatpush.bf16.msra.mxu0 0
    %61 = vmatpush.bf16.msra.mxu0 0
    %62 = vmatpush.bf16.msra.mxu0 %v49
    %63 = vmatpush.bf16.msra.mxu0 %v48
    %64 = vmatmul.bf16.gmra.mxu0 %v54
    %v65 = vpop.f32.mrf.mxu0
    %v66 = vadd.f32 %v38, %v65
    %v67 = vpop.f32.mrf.mxu0
    %v68 = vadd.f32 %v38, %v67
    %69 = vdwg.mxu0
    %v70 = vmul.f32 %v66, 0.5
    %v71 = vmul.f32 %v68, 0.5
    %v72 = vmul.f32 %v66, 0.70710677
    %v73 = vmul.f32 %v68, 0.70710677
    %v74 = vmul.f32 %v72, %v72
    %v75 = vmin.f32 16.0, %v74
    %v76 = vmul.f32 %v75, 2.1237322e-06
    %v77 = vadd.f32 %v76, 0.00028619796
    %v78 = vmul.f32 %v75, %v77
    %v79 = vadd.f32 %v78, 0.0036580483
    %v80 = vmul.f32 %v75, %v79
    %v81 = vadd.f32 %v80, 0.05243302
    %v82 = vmul.f32 %v75, %v81
    %v83 = vadd.f32 %v82, 0.18741608
    %v84 = vmul.f32 %v75, %v83
    %v85 = vadd.f32 %v84, 1.1283791
    %v86 = vmul.f32 %v72, %v85
    %v87 = vmul.f32 %v75, 3.8918573e-05
    %v88 = vadd.f32 %v87, 0.001143296
    %v89 = vmul.f32 %v75, %v88
    %v90 = vadd.f32 %v89, 0.014752088
    %v91 = vmul.f32 %v75, %v90
    %v92 = vadd.f32 %v91, 0.112945676
    %v93 = vmul.f32 %v75, %v92
    %v94 = vadd.f32 %v93, 0.4994258
    %v95 = vmul.f32 %v75, %v94
    %v96 = vadd.f32 %v95, 1.0
    %v97 = vrcp.pop %v96
    %v98 = vmul.f32 %v96, %v97
    %v99 = vsub.f32 1.0, %v98
    %v100 = vmul.f32 %v97, %v99
    %v101 = vadd.f32 %v97, %v100
    %vm102 = vweird.f32 %v96
    %vm103 = vweird.f32 %v97
    %vm104 = vmor %vm102, %vm103
    %v105 = vsel %vm104, %v97, %v101
    %v106 = vand.u32 2147483647, %v96
    %vm107 = vcmp.eq.f32.partialorder %v106, 8.507059e+37
    %v108 = vand.u32 %v96, 2147483648
    %v109 = vor.u32 1.1754944e-38, %v108
    %v110 = vsel %vm107, %v109, %v105
    %v111 = vmul.f32 %v86, %v110
    %v112 = vmin.f32 %v111, 1.0
    %v113 = vmax.f32 %v112, -1.0
    %v114 = vmul.f32 %v73, %v73
    %v115 = vmin.f32 16.0, %v114
    %v116 = vmul.f32 %v115, 2.1237322e-06
    %v117 = vadd.f32 %v116, 0.00028619796
    %v118 = vmul.f32 %v115, %v117
    %v119 = vadd.f32 %v118, 0.0036580483
    %v120 = vmul.f32 %v115, %v119
    %v121 = vadd.f32 %v120, 0.05243302
    %v122 = vmul.f32 %v115, %v121
    %v123 = vadd.f32 %v122, 0.18741608
    %v124 = vmul.f32 %v115, %v123
    %v125 = vadd.f32 %v124, 1.1283791
    %v126 = vmul.f32 %v73, %v125
    %v127 = vmul.f32 %v115, 3.8918573e-05
    %v128 = vadd.f32 %v127, 0.001143296
    %v129 = vmul.f32 %v115, %v128
    %v130 = vadd.f32 %v129, 0.014752088
    %v131 = vmul.f32 %v115, %v130
    %v132 = vadd.f32 %v131, 0.112945676
    %v133 = vmul.f32 %v115, %v132
    %v134 = vadd.f32 %v133, 0.4994258
    %v135 = vmul.f32 %v115, %v134
    %v136 = vadd.f32 %v135, 1.0
    %v137 = vrcp.pop %v136
    %v138 = vmul.f32 %v136, %v137
    %v139 = vsub.f32 1.0, %v138
    %v140 = vmul.f32 %v137, %v139
    %v141 = vadd.f32 %v137, %v140
    %vm142 = vweird.f32 %v136
    %vm143 = vweird.f32 %v137
    %vm144 = vmor %vm142, %vm143
    %v145 = vsel %vm144, %v137, %v141
    %v146 = vand.u32 2147483647, %v136
    %vm147 = vcmp.eq.f32.partialorder %v146, 8.507059e+37
    %v148 = vand.u32 %v136, 2147483648
    %v149 = vor.u32 1.1754944e-38, %v148
    %v150 = vsel %vm147, %v149, %v145
    %v151 = vmul.f32 %v126, %v150
    %v152 = vmin.f32 %v151, 1.0
    %v153 = vmax.f32 %v152, -1.0
    %v154 = vadd.f32 %v113, 1.0
    %v155 = vadd.f32 %v153, 1.0
    %v156 = vmul.f32 %v70, %v154
    %v157 = vmul.f32 %v71, %v155
    %v158 = vld [vmem:[#allocation2] sm:$0xff]
    %v159 = vld [vmem:[#allocation2 + $0x8] sm:$0xff]
    %v160 = vpack.c.bf16 %v157, %v156
    %v161 = vld [vmem:[%s3] sm:$0xf]
    %v162 = vld [vmem:[%s3 + $0x4] sm:$0xf]
    %v163 = vld [vmem:[%s3 + $0x8] sm:$0xf]
    %v164 = vld [vmem:[%s3 + $0xc] sm:$0xf]
    %v165 = vld [vmem:[%s3 + $0x10] sm:$0xf]
    %v166 = vld [vmem:[%s3 + $0x14] sm:$0xf]
    %v167 = vld [vmem:[%s3 + $0x18] sm:$0xf]
    %v168 = vld [vmem:[%s3 + $0x1c] sm:$0xf]
    %v169 = vld [vmem:[%s3 + $0x20] sm:$0xf]
    %v170 = vld [vmem:[%s3 + $0x24] sm:$0xf]
    %v171 = vld [vmem:[%s3 + $0x28] sm:$0xf]
    %v172 = vld [vmem:[%s3 + $0x2c] sm:$0xf]
    %v173 = vld [vmem:[%s3 + $0x30] sm:$0xf]
    %v174 = vld [vmem:[%s3 + $0x34] sm:$0xf]
    %v175 = vld [vmem:[%s3 + $0x38] sm:$0xf]
    %v176 = vld [vmem:[%s3 + $0x3c] sm:$0xf]
    %v193 = vunpack.c.l.b16 %v161
    %v194 = vunpack.c.l.b16 %v162
    %v195 = vunpack.c.l.b16 %v163
    %v196 = vunpack.c.l.b16 %v164
    %v197 = vunpack.c.l.b16 %v165
    %v198 = vunpack.c.l.b16 %v166
    %v199 = vunpack.c.l.b16 %v167
    %v200 = vunpack.c.l.b16 %v168
    %v201 = vunpack.c.l.b16 %v169
    %v202 = vunpack.c.l.b16 %v170
    %v203 = vunpack.c.l.b16 %v171
    %v204 = vunpack.c.l.b16 %v172
    %v205 = vunpack.c.l.b16 %v173
    %v206 = vunpack.c.l.b16 %v174
    %v207 = vunpack.c.l.b16 %v175
    %v208 = vunpack.c.l.b16 %v176
    %v209 = vpack.c.b16 %v194, %v193
    %v210 = vpack.c.b16 %v196, %v195
    %v211 = vpack.c.b16 %v198, %v197
    %v212 = vpack.c.b16 %v200, %v199
    %v213 = vpack.c.b16 %v202, %v201
    %v214 = vpack.c.b16 %v204, %v203
    %v215 = vpack.c.b16 %v206, %v205
    %v216 = vpack.c.b16 %v208, %v207
    %225 = vmatpush.bf16.msra.mxu0 %v216
    %226 = vmatpush.bf16.msra.mxu0 %v215
    %227 = vmatpush.bf16.msra.mxu0 %v214
    %228 = vmatpush.bf16.msra.mxu0 %v213
    %229 = vmatpush.bf16.msra.mxu0 %v212
    %230 = vmatpush.bf16.msra.mxu0 %v211
    %231 = vmatpush.bf16.msra.mxu0 %v210
    %232 = vmatpush.bf16.msra.mxu0 %v209
    %233 = vmatmul.bf16.gmra.mxu0 %v160
    %v234 = vpop.f32.mrf.mxu0
    %v235 = vadd.f32 0.0, %v234
    %v236 = vpop.f32.mrf.mxu0
    %v237 = vadd.f32 0.0, %v236
    %238 = vdwg.mxu0
    %v239 = vadd.f32 %v158, %v235
    %v240 = vadd.f32 %v159, %v237
    %241 = vst.msk [vmem:[#allocation2] sm:$0xff] %vm52, %v239
    %242 = vst.msk [vmem:[#allocation2 + $0x8] sm:$0xff] %vm52, %v240
    // Predicated region
    $region26: #{le_mlp_forward.1} parent=1 // pred_check
      %p243 = pneg %p22
    $region27: #{le_mlp_forward.1} parent=1 // pred_check_branch
      %245 = sbr.rel (%p243) target = $region29
    $region28: #{le_mlp_forward.1} parent=1 // pred_region
      %v246 = vld [vmem:[#allocation2] sm:$0xff]
      %v247 = vld [vmem:[#allocation2 + $0x8] sm:$0xff]
      %v248 = vld [vmem:[%s4] sm:$0x1]
      %v250 = vperm.slane %v248, 0
      %v252 = vadd.f32 %v246, %v250
      %v253 = vadd.f32 %v247, %v250
      %254 = vst.msk [vmem:[#allocation3] sm:$0xff] %vm52, %v252
      %255 = vst.msk [vmem:[#allocation3 + $0x8] sm:$0xff] %vm52, %v253
    $region29: #{le_mlp_forward.1} parent=1 // pred_fallthru
      _
    // Predicated region
    $region30: #{le_mlp_forward.1} parent=1 // pred_check
      _
    $region31: #{le_mlp_forward.1} parent=1 // pred_check_branch
      %257 = sbr.rel (0) target = $region33
    $region32: #{le_mlp_forward.1} parent=1 // pred_region
      %259 = vsyncadd [#allocation4], 0
      %s260 = sshll.u32 [#allocation3], 4
      %s261 = int_to_ptr.vmem [resolvable:$true] %s260
      %s262 = sshll.u32 %s5, 4
      %s263 = int_to_ptr.hbm [resolvable:$true] %s262
      %268 = dma.vmem_to_hbm [thread:$0]  %s261, 256, %s263, [#allocation4], 128, 128, 8
    $region33: #{le_mlp_forward.1} parent=1 // pred_fallthru
      _
    // Predicated region
    $region34: #{le_mlp_forward.1} parent=1 // pred_check
      _
    $region35: #{le_mlp_forward.1} parent=1 // pred_check_branch
      %270 = sbr.rel (0) target = $region37
    $region36: #{le_mlp_forward.1} parent=1 // pred_region
      %272 = dma.done [#allocation4], 256
    $region37: #{le_mlp_forward.1} parent=1 // pred_fallthru
      _
    %273 = vsyncpa [#allocation4], 1

</llo_original>
